<compile_context>
chip_gen: v7x
topology: tpu7x:2x2x1
jax: 0.10.0
libtpu: 0.0.40
codegen_flags: <defaults>
</compile_context>

<pallas_src>
import jax
import jax.numpy as jnp
from jax.experimental import pallas as pl
from jax.experimental.pallas import tpu as pltpu


def _round_up(x, m):
    return ((x + m - 1) // m) * m


# ----------------------------------------------------------------------------
# Kernels
# ----------------------------------------------------------------------------
def _matmul_kernel_single_k(x_ref, w_ref, o_ref):
    """Whole K fits in one tile: write the result directly (no accumulator)."""
    o_ref[...] = jnp.dot(
        x_ref[...], w_ref[...], preferred_element_type=jnp.float32
    ).astype(o_ref.dtype)


def _matmul_kernel_f32out(x_ref, w_ref, o_ref):
    """f32 output: accumulate directly in the resident output block.
    The first k step assigns (no zero-init store + load/add RMW on step 0)."""
    p = jnp.dot(x_ref[...], w_ref[...], preferred_element_type=jnp.float32)
    k = pl.program_id(2)

    @pl.when(k == 0)
    def _():
        o_ref[...] = p

    @pl.when(k > 0)
    def _():
        o_ref[...] += p


def _matmul_kernel_acc(x_ref, w_ref, o_ref, acc_ref):
    """Narrow output dtype: f32 scratch accumulator, cast once on the last step."""
    p = jnp.dot(x_ref[...], w_ref[...], preferred_element_type=jnp.float32)
    k = pl.program_id(2)

    @pl.when(k == 0)
    def _():
        acc_ref[...] = p

    @pl.when(k > 0)
    def _():
        acc_ref[...] += p

    @pl.when(k == pl.num_programs(2) - 1)
    def _():
        o_ref[...] = acc_ref[...].astype(o_ref.dtype)


# ----------------------------------------------------------------------------
# Per-generation budget / tile selection
# ----------------------------------------------------------------------------
def _device_kind():
    try:
        return jax.devices()[0].device_kind.lower()
    except Exception:
        return ""


def _vmem_budget_bytes():
    cap = 64 * 1024 * 1024  # conservative default = v7x per-TC VMEM
    try:
        cap = int(pltpu.get_tpu_info().vmem_capacity_bytes)
    except Exception:
        pass
    kind = _device_kind()
    if "v7" in kind:
        # Per-TC VMEM on v7x is 64 MiB; clamp in case the query reports the
        # 2-TC chip total (128 MiB) which would exceed physical per-TC VMEM.
        cap = min(cap, 64 * 1024 * 1024)
    # 70% of capacity minus explicit headroom for Mosaic internal scratch,
    # semaphores and compiler temporaries.
    return max(24 * 1024 * 1024, int(cap * 0.7) - 4 * 1024 * 1024)


def _tile_side_target():
    """Square output-tile side that puts tm*tn/(tm+tn) above the per-generation
    compute/bandwidth ridge (bf16 flops/byte)."""
    kind = _device_kind()
    if "v6" in kind:
        return 1536   # ridge ~680 flops/byte
    if "v7" in kind:
        return 768    # per-TC ridge ~310 flops/byte
    if "v5" in kind:
        return 512    # ridge ~240 flops/byte
    return 1024       # unknown generation: middle of the road


_TK_CAP = 2048  # larger tk only amortizes per-step overhead (already negligible
                # at these tile sizes); keep VMEM for larger output tiles.


def _pick_tiles(M, N, K, x_bytes, w_bytes, out_bytes, use_acc, budget, side):
    sub = 8 if x_bytes >= 4 else (16 if x_bytes == 2 else 32)

    def usage(tm_, tn_, tk_):
        u = (2 * tm_ * tk_ * x_bytes      # x tile, double-buffered
             + 2 * tk_ * tn_ * w_bytes    # [K, N] weight tile, double-buffered
             + 2 * tm_ * tn_ * out_bytes) # resident output tile (+ writeback)
        if use_acc:
            u += tm_ * tn_ * 4            # f32 accumulator scratch
        return u

    # Start: square-ish output tiles at the per-generation intensity target.
    tm = min(_round_up(M, sub), _round_up(side, sub))
    tn = min(_round_up(N, 128), _round_up(side, 128))
    tk = min(_round_up(K, 128), _TK_CAP)

    # --- shrink to fit VMEM: tk first, then the larger of tm / tn -----------
    while usage(tm, tn, tk) > budget and tk > 512:
        tk = max(512, _round_up(tk // 2, 128))
    while usage(tm, tn, tk) > budget and (tm > sub or tn > 128):
        if tm >= tn and tm > sub:
            tm = max(sub, _round_up(tm // 2, sub))
        elif tn > 128:
            tn = max(128, _round_up(tn // 2, 128))
        else:
            tm = max(sub, _round_up(tm // 2, sub))
    while usage(tm, tn, tk) > budget and tk > 128:
        tk = max(128, _round_up(tk // 2, 128))

    # --- grow to fill remaining VMEM -----------------------------------------
    # Growing tm/tn cuts re-streams of the other operand (higher arithmetic
    # intensity); grow the smaller side first to keep output tiles square-ish.
    cap_m = _round_up(M, sub)
    cap_n = _round_up(N, 128)
    cap_k = min(_round_up(K, 128), _TK_CAP)
    grew = True
    while grew:
        grew = False
        order = ("m", "n", "k") if tm <= tn else ("n", "m", "k")
        for ax in order:
            if ax == "m" and tm < cap_m:
                cand = min(cap_m, tm * 2)
                if usage(cand, tn, tk) <= budget:
                    tm, grew = cand, True
                    break
            elif ax == "n" and tn < cap_n:
                cand = min(cap_n, tn * 2)
                if usage(tm, cand, tk) <= budget:
                    tn, grew = cand, True
                    break
            elif ax == "k" and tk < cap_k:
                cand = min(cap_k, tk * 2)
                if usage(tm, tn, cand) <= budget:
                    tk, grew = cand, True
                    break

    # --- re-balance each tile against its dim so the last block isn't mostly
    #     padding (e.g. M=300 with tm=256 -> tm=152-ish rounded to sublane).
    def rebalance(dim, t, align):
        nblk = -(-dim // t)
        return _round_up(-(-dim // nblk), align)

    tm = rebalance(M, tm, sub)
    tn = rebalance(N, tn, 128)
    tk = rebalance(K, tk, 128)
    return tm, tn, tk


# ----------------------------------------------------------------------------
# Forward implementation
# ----------------------------------------------------------------------------
def _prepare_weight_kn(weight_nk, tn, tk):
    """Transpose nn.Linear weight [N, K] -> [K, N] and zero-pad to tile multiples."""
    N, K = weight_nk.shape
    K_p, N_p = _round_up(K, tk), _round_up(N, tn)
    w_t = weight_nk.T
    if (K_p, N_p) != (K, N):
        w_t = jnp.pad(w_t, ((0, K_p - K), (0, N_p - N)))
    return w_t


def _scoped_linear_forward(x, weight_nk, get_weight_kn, compute_dtype=None):
    """output = x @ weight_nk.T via a tiled Pallas MXU matmul.

    get_weight_kn(tn, tk, dtype) must return the pre-transposed, zero-padded
    [K_p, N_p] weight (cached by ScopedLinearAllReduce; recomputed per call by
    the functional wrapper).
    """
    *lead, K = x.shape
    N, K_w = weight_nk.shape
    assert K == K_w, "in_features mismatch"

    M = 1
    for d in lead:
        M *= d
    out_dtype = jnp.result_type(x.dtype, weight_nk.dtype)

    # Tiny problems: pallas_call fixed cost dominates; let XLA's fused GEMM win.
    if M < 8 or K < 128 or N < 128:
        return jnp.matmul(x, weight_nk.T).astype(out_dtype)

    # Common compute dtype (avoids mixed-dtype dot; optional bf16-compute knob
    # for v5e where the MXU has no native f32 path).
    comp_dtype = (jnp.dtype(compute_dtype) if compute_dtype is not None
                  else jnp.dtype(out_dtype))

    x2d = x.reshape(M, K)
    if x2d.dtype != comp_dtype:
        x2d = x2d.astype(comp_dtype)

    x_bytes = jnp.dtype(comp_dtype).itemsize
    w_bytes = x_bytes
    out_bytes = jnp.dtype(out_dtype).itemsize
    use_acc = out_dtype != jnp.float32

    budget = _vmem_budget_bytes()
    side = _tile_side_target()
    tm, tn, tk = _pick_tiles(M, N, K, x_bytes, w_bytes, out_bytes,
                             use_acc, budget, side)

    M_p, N_p, K_p = _round_up(M, tm), _round_up(N, tn), _round_up(K, tk)
    grid = (M_p // tm, N_p // tn, K_p // tk)
    grid_m, grid_n, grid_k = grid

    if (M_p, K_p) != (M, K):
        x2d = jnp.pad(x2d, ((0, M_p - M), (0, K_p - K)))   # zero K-pad is exact
    w_kn = get_weight_kn(tn, tk, comp_dtype)               # [K_p, N_p], cached

    in_specs = [
        pl.BlockSpec((tm, tk), lambda i, j, k: (i, k)),    # x tile
        pl.BlockSpec((tk, tn), lambda i, j, k: (k, j)),    # weight tile [K, N]
    ]
    out_specs = pl.BlockSpec((tm, tn), lambda i, j, k: (i, j))

    if grid_k == 1:
        kernel, scratch = _matmul_kernel_single_k, []
    elif out_dtype == jnp.float32:
        kernel, scratch = _matmul_kernel_f32out, []
    else:
        kernel, scratch = _matmul_kernel_acc, [pltpu.VMEM((tm, tn), jnp.float32)]

    # Megacore split (v7x 2-TC): shard the grid axis whose operand re-stream is
    # cheaper so the dominant HBM stream is NOT duplicated across cores.
    x_stream = M_p * K_p * x_bytes
    w_stream = N_p * K_p * w_bytes
    if grid_n >= 2 and (w_stream > x_stream or grid_m < 2):
        dim_sem = ("arbitrary", "parallel", "arbitrary")   # decode: split N
    else:
        dim_sem = ("parallel", "arbitrary", "arbitrary")   # prefill: split M

    cost = pl.CostEstimate(
        flops=2 * M_p * N_p * K_p,
        transcendentals=0,
        bytes_accessed=(M_p * K_p * x_bytes * grid_n
                        + N_p * K_p * w_bytes * grid_m
                        + M_p * N_p * out_bytes),
    )

    out2d = pl.pallas_call(
        kernel,
        out_shape=jax.ShapeDtypeStruct((M_p, N_p), out_dtype),
        grid_spec=pltpu.PrefetchScalarGridSpec(
            num_scalar_prefetch=0,
            grid=grid,
            in_specs=in_specs,
            out_specs=out_specs,
            scratch_shapes=scratch,
        ),
        compiler_params=pltpu.CompilerParams(
            dimension_semantics=dim_sem,
            vmem_limit_bytes=budget + 4 * 1024 * 1024,
        ),
        cost_estimate=cost,
    )(x2d, w_kn)

    if (M_p, N_p) != (M, N):
        out2d = out2d[:M, :N]
    return out2d.reshape(*lead, N)


def scoped_linear_forward(x, weight, compute_dtype=None):
    """One-shot functional form (transposes/pads the weight per call).
    Prefer ScopedLinearAllReduce, which caches the prepared weight."""
    weight = jnp.asarray(weight)

    def get_w(tn, tk, dtype):
        w = weight if weight.dtype == dtype else weight.astype(dtype)
        return _prepare_weight_kn(w, tn, tk)

    return _scoped_linear_forward(x, weight, get_w, compute_dtype)


class ScopedLinearAllReduce:
    """JAX/Pallas port of optimum-habana ScopedLinearAllReduce.

    forward(input) == input @ weight.T  (bias only in post_all_reduce).
    The transposed / padded weight is prepared once per tile configuration and
    cached, so no weight transpose or pad runs on the per-call forward path.
    """

    def __init__(self, weight, bias=None, mp_group=None, compute_dtype=None):
        self.weight = jnp.asarray(weight)          # [N, K], nn.Linear layout
        self.bias = None if bias is None else jnp.asarray(bias)
        self.mp_group = mp_group
        self.compute_dtype = compute_dtype
        self._w_cache = {}                         # (tk, tn, dtype) -> [K_p, N_p]

    def _weight_kn(self, tn, tk, dtype):
        key = (int(tk), int(tn), jnp.dtype(dtype).name)
        w = self._w_cache.get(key)
        if w is None:
            src = self.weight if self.weight.dtype == dtype else self.weight.astype(dtype)
            w = jax.block_until_ready(_prepare_weight_kn(src, tn, tk))
            self._w_cache[key] = w
        return w

    def forward(self, x):
        return _scoped_linear_forward(x, self.weight, self._weight_kn,
                                      self.compute_dtype)

    __call__ = forward

    def all_reduce(self, x):
        # TODO(synk): DeepSpeed inference_all_reduce over mp_group is a
        # cross-device collective — identity on a single device / out of scope.
        return x

    def post_all_reduce(self, x):
        return x + self.bias if self.bias is not None else x


# ----------------------------------------------------------------------------
# Self-test
# ----------------------------------------------------------------------------
if __name__ == "__main__":
    key = jax.random.PRNGKey(0)
    k1, k2, k3, k4, k5 = jax.random.split(key, 5)

    # --- Test 1: prefill-like f32, single-k-tile path, cached-weight class ---
    batch, seq, in_features, out_features = 2, 64, 256, 512
    x = jax.random.normal(k1, (batch, seq, in_features), dtype=jnp.float32)
    w = jax.random.normal(k2, (out_features, in_features), dtype=jnp.float32)
    w = w * (1.0 / jnp.sqrt(in_features))
    b = jax.random.normal(k3, (out_features,), dtype=jnp.float32)

    layer = ScopedLinearAllReduce(w, bias=b)
    out = jax.block_until_ready(layer(x))
    out_again = jax.block_until_ready(layer(x))   # second call hits the weight cache
    ref = jnp.matmul(x, w.T)
    assert out.shape == (batch, seq, out_features)
    assert jnp.allclose(out, ref, atol=2e-2, rtol=2e-2)
    assert jnp.allclose(out_again, ref, atol=2e-2, rtol=2e-2)

    # forward excludes the bias (matches the PyTorch module); bias lands in
    # post_all_reduce after the (single-device identity) all_reduce.
    post = layer.post_all_reduce(layer.all_reduce(out))
    assert jnp.allclose(post, ref + b, atol=2e-2, rtol=2e-2)

    # --- Test 2: multi-k-tile f32 path (accumulate in resident output block) --
    K_big, N_small = 4096, 256
    x2 = jax.random.normal(k4, (1, 64, K_big), dtype=jnp.float32)
    w2 = jax.random.normal(k5, (N_small, K_big), dtype=jnp.float32)
    w2 = w2 * (1.0 / jnp.sqrt(K_big))
    out2 = jax.block_until_ready(scoped_linear_forward(x2, w2))
    ref2 = jnp.matmul(x2, w2.T)
    assert out2.shape == (1, 64, N_small)
    assert jnp.allclose(out2, ref2, atol=2e-2, rtol=2e-2)

    # --- Test 3: multi-k-tile bf16 path (f32 scratch-accumulator kernel) ------
    x3 = x2.astype(jnp.bfloat16)
    w3 = w2.astype(jnp.bfloat16)
    out3 = jax.block_until_ready(scoped_linear_forward(x3, w3))
    ref3 = jnp.matmul(x3.astype(jnp.float32), w3.astype(jnp.float32).T)
    assert out3.dtype == jnp.bfloat16
    assert jnp.allclose(out3.astype(jnp.float32), ref3, atol=5e-2, rtol=5e-2)

    print("KERNEL_OK")
</pallas_src>

<mosaic_0001>
module attributes {stable_mosaic.version = 11 : i64} {
  func.func @_matmul_kernel_single_k(%arg0: i32, %arg1: i32, %arg2: i32, %arg3: memref<128x256xf32, #tpu.memory_space<vmem>>, %arg4: memref<256x512xf32, #tpu.memory_space<vmem>>, %arg5: memref<128x512xf32, #tpu.memory_space<vmem>>) attributes {dimension_semantics = [#tpu.dimension_semantics<parallel>, #tpu.dimension_semantics<arbitrary>, #tpu.dimension_semantics<arbitrary>], iteration_bounds = array<i64: 1, 1, 1>, scalar_prefetch = 0 : i64, scratch_operands = 0 : i64, tpu.core_type = #tpu.core_type<tc>, window_params = [{transform_indices = @transform_0, window_bounds = array<i64: 128, 256>}, {transform_indices = @transform_1, window_bounds = array<i64: 256, 512>}, {transform_indices = @transform_2, window_bounds = array<i64: 128, 512>}]} {
    %c0 = arith.constant 0 : index
    %c0_0 = arith.constant 0 : index
    %0 = vector.load %arg3[%c0, %c0_0] : memref<128x256xf32, #tpu.memory_space<vmem>>, vector<128x256xf32>
    %c0_1 = arith.constant 0 : index
    %c0_2 = arith.constant 0 : index
    %1 = vector.load %arg4[%c0_1, %c0_2] : memref<256x512xf32, #tpu.memory_space<vmem>>, vector<256x512xf32>
    %cst = arith.constant dense<0.000000e+00> : vector<128x512xf32>
    %2 = tpu.matmul %0, %1, %cst {dimension_numbers = #tpu.dot_dimension_numbers<[1], [0], [0], [1], [0, 0, 1, 1], [], []>} : vector<128x256xf32>, vector<256x512xf32>, vector<128x512xf32> -> vector<128x512xf32>
    %c0_3 = arith.constant 0 : index
    %c0_4 = arith.constant 0 : index
    %3 = vector.load %arg5[%c0_3, %c0_4] : memref<128x512xf32, #tpu.memory_space<vmem>>, vector<128x512xf32>
    tpu.vector_store %arg5[%c0_3, %c0_4], %2 {strides = array<i32>} : memref<128x512xf32, #tpu.memory_space<vmem>>, vector<128x512xf32>,
    return
  }
  func.func @transform_0(%arg0: i32, %arg1: i32, %arg2: i32) -> (i32, i32) {
    %c0_i32 = arith.constant 0 : i32
    return %arg0, %arg2 : i32, i32
  }
  func.func @transform_1(%arg0: i32, %arg1: i32, %arg2: i32) -> (i32, i32) {
    %c0_i32 = arith.constant 0 : i32
    return %arg2, %arg1 : i32, i32
  }
  func.func @transform_2(%arg0: i32, %arg1: i32, %arg2: i32) -> (i32, i32) {
    %c0_i32 = arith.constant 0 : i32
    return %arg0, %arg1 : i32, i32
  }
}

</mosaic_0001>

<llo_original>
// kernel: tpu_custom_call.1
$region0: #{tpu_custom_call.1}
  #allocation0 [shape = 'u32[]', space=smem, size = 0x4, offset = 0x4, fixed_abs, tag = 'smem constant byte address 0x4 - core index']
  #allocation1 [shape = 'u32[144,128]{1,0:T(1,128)}', space=vmem, size = 0x12000, scoped, tag = 'internal scratch']
  %s0 = inlined_call_operand.hbm [shape: f32[128,256], index: 0, kind: input, shape index: {}]
  %s1 = inlined_call_operand.hbm [shape: f32[256,512], index: 1, kind: input, shape index: {}]
  %s2 = inlined_call_operand.hbm [shape: f32[128,512], index: 2, kind: output, shape index: {}]
  %s3 = sld [smem:[#allocation0]]
  $region26: #{tpu_custom_call.1} parent=0
    _
  %s5 = ssub.s32 1, %s3
  %s6 = scalar_select 0, %s5, %s3
  $region1: #{tpu_custom_call.1} parent=0
    #allocation2 [shape = 'u8[131072]{0}', space=vmem, size = 0x20000, scoped, tag = 'input window, operand 0, single buffered']
    #allocation3 [shape = 's32[1]{0}', space=sflag, size = 0x4, scoped, tag = 'scoped memory for tpu_custom_call.1']
    #allocation4 [shape = 's32[1]{0}', space=sflag, size = 0x4, scoped, tag = 'scoped memory for tpu_custom_call.1']
    #allocation5 [shape = 'u8[524288]{0}', space=vmem, size = 0x80000, scoped, tag = 'input window, operand 1, single buffered']
    #allocation6 [shape = 's32[1]{0}', space=sflag, size = 0x4, scoped, tag = 'scoped memory for tpu_custom_call.1']
    #allocation7 [shape = 'u8[262144]{0}', space=vmem, size = 0x40000, scoped, tag = 'output window, operand 0, single buffered']
    %7 = vsyncpa [#allocation3], 0
    %8 = vsyncpa [#allocation6], 0
    %9 = vsyncpa [#allocation4], 0
    // Predicated region
    $region2: #{tpu_custom_call.1} parent=1 // pred_check
      _
    $region3: #{tpu_custom_call.1} parent=1 // pred_check_branch
      %11 = sbr.rel (0) target = $region5
    $region4: #{tpu_custom_call.1} parent=1 // pred_region
      %s13 = ssub.s32 4096, 4096
      %14 = vsyncadd [#allocation3], %s13
      %s15 = sshll.u32 [#allocation2], 4
      %s16 = int_to_ptr.vmem [resolvable:$true] %s15
      %21 = dma.hbm_to_vmem [thread:$0]  %s0, 4096, %s16, [#allocation3], 256, 256, 16
    $region5: #{tpu_custom_call.1} parent=1 // pred_fallthru
      _
    // Predicated region
    $region6: #{tpu_custom_call.1} parent=1 // pred_check
      _
    $region7: #{tpu_custom_call.1} parent=1 // pred_check_branch
      %23 = sbr.rel (0) target = $region9
    $region8: #{tpu_custom_call.1} parent=1 // pred_region
      %s25 = ssub.s32 16384, 16384
      %26 = vsyncadd [#allocation6], %s25
      %s27 = sshll.u32 [#allocation5], 4
      %s28 = int_to_ptr.vmem [resolvable:$true] %s27
      %33 = dma.hbm_to_vmem [thread:$0]  %s1, 16384, %s28, [#allocation6], 512, 512, 32
    $region9: #{tpu_custom_call.1} parent=1 // pred_fallthru
      _
    // Predicated region
    $region10: #{tpu_custom_call.1} parent=1 // pred_check
      _
    $region11: #{tpu_custom_call.1} parent=1 // pred_check_branch
      %35 = sbr.rel (0) target = $region13
    $region12: #{tpu_custom_call.1} parent=1 // pred_region
      %36 = dma.done [#allocation3], 4096
    $region13: #{tpu_custom_call.1} parent=1 // pred_fallthru
      _
    // Predicated region
    $region14: #{tpu_custom_call.1} parent=1 // pred_check
      _
    $region15: #{tpu_custom_call.1} parent=1 // pred_check_branch
      %38 = sbr.rel (0) target = $region17
    $region16: #{tpu_custom_call.1} parent=1 // pred_region
      %39 = dma.done [#allocation6], 16384
    $region17: #{tpu_custom_call.1} parent=1 // pred_fallthru
      _
    %v40 = vld [vmem:[#allocation2] sm:$0xff]
    %v41 = vld [vmem:[#allocation2 + $0x8] sm:$0xff]
    %v42 = vld [vmem:[#allocation2 + $0x10] sm:$0xff]
    %v43 = vld [vmem:[#allocation2 + $0x18] sm:$0xff]
    %v44 = vld [vmem:[#allocation2 + $0x20] sm:$0xff]
    %v45 = vld [vmem:[#allocation2 + $0x28] sm:$0xff]
    %v46 = vld [vmem:[#allocation2 + $0x30] sm:$0xff]
    %v47 = vld [vmem:[#allocation2 + $0x38] sm:$0xff]
    %v48 = vld [vmem:[#allocation2 + $0x40] sm:$0xff]
    %v49 = vld [vmem:[#allocation2 + $0x48] sm:$0xff]
    %v50 = vld [vmem:[#allocation2 + $0x50] sm:$0xff]
    %v51 = vld [vmem:[#allocation2 + $0x58] sm:$0xff]
    %v52 = vld [vmem:[#allocation2 + $0x60] sm:$0xff]
    %v53 = vld [vmem:[#allocation2 + $0x68] sm:$0xff]
    %v54 = vld [vmem:[#allocation2 + $0x70] sm:$0xff]
    %v55 = vld [vmem:[#allocation2 + $0x78] sm:$0xff]
    %v56 = vld [vmem:[#allocation2 + $0x80] sm:$0xff]
    %v57 = vld [vmem:[#allocation2 + $0x88] sm:$0xff]
    %v58 = vld [vmem:[#allocation2 + $0x90] sm:$0xff]
    %v59 = vld [vmem:[#allocation2 + $0x98] sm:$0xff]
    %v60 = vld [vmem:[#allocation2 + $0xa0] sm:$0xff]
    %v61 = vld [vmem:[#allocation2 + $0xa8] sm:$0xff]
    %v62 = vld [vmem:[#allocation2 + $0xb0] sm:$0xff]
    %v63 = vld [vmem:[#allocation2 + $0xb8] sm:$0xff]
    %v64 = vld [vmem:[#allocation2 + $0xc0] sm:$0xff]
    %v65 = vld [vmem:[#allocation2 + $0xc8] sm:$0xff]
    %v66 = vld [vmem:[#allocation2 + $0xd0] sm:$0xff]
    %v67 = vld [vmem:[#allocation2 + $0xd8] sm:$0xff]
    %v68 = vld [vmem:[#allocation2 + $0xe0] sm:$0xff]
    %v69 = vld [vmem:[#allocation2 + $0xe8] sm:$0xff]
    %v70 = vld [vmem:[#allocation2 + $0xf0] sm:$0xff]
    %v71 = vld [vmem:[#allocation2 + $0xf8] sm:$0xff]
    %v72 = vld [vmem:[#allocation5] sm:$0xff]
    %v73 = vld [vmem:[#allocation5 + $0x8] sm:$0xff]
    %v74 = vld [vmem:[#allocation5 + $0x10] sm:$0xff]
    %v75 = vld [vmem:[#allocation5 + $0x18] sm:$0xff]
    %v76 = vld [vmem:[#allocation5 + $0x20] sm:$0xff]
    %v77 = vld [vmem:[#allocation5 + $0x28] sm:$0xff]
    %v78 = vld [vmem:[#allocation5 + $0x30] sm:$0xff]
    %v79 = vld [vmem:[#allocation5 + $0x38] sm:$0xff]
    %v80 = vld [vmem:[#allocation5 + $0x40] sm:$0xff]
    %v81 = vld [vmem:[#allocation5 + $0x48] sm:$0xff]
    %v82 = vld [vmem:[#allocation5 + $0x50] sm:$0xff]
    %v83 = vld [vmem:[#allocation5 + $0x58] sm:$0xff]
    %v84 = vld [vmem:[#allocation5 + $0x60] sm:$0xff]
    %v85 = vld [vmem:[#allocation5 + $0x68] sm:$0xff]
    %v86 = vld [vmem:[#allocation5 + $0x70] sm:$0xff]
    %v87 = vld [vmem:[#allocation5 + $0x78] sm:$0xff]
    %v88 = vld [vmem:[#allocation5 + $0x80] sm:$0xff]
    %v89 = vld [vmem:[#allocation5 + $0x88] sm:$0xff]
    %v90 = vld [vmem:[#allocation5 + $0x90] sm:$0xff]
    %v91 = vld [vmem:[#allocation5 + $0x98] sm:$0xff]
    %v92 = vld [vmem:[#allocation5 + $0xa0] sm:$0xff]
    %v93 = vld [vmem:[#allocation5 + $0xa8] sm:$0xff]
    %v94 = vld [vmem:[#allocation5 + $0xb0] sm:$0xff]
    %v95 = vld [vmem:[#allocation5 + $0xb8] sm:$0xff]
    %v96 = vld [vmem:[#allocation5 + $0xc0] sm:$0xff]
    %v97 = vld [vmem:[#allocation5 + $0xc8] sm:$0xff]
    %v98 = vld [vmem:[#allocation5 + $0xd0] sm:$0xff]
    %v99 = vld [vmem:[#allocation5 + $0xd8] sm:$0xff]
    %v100 = vld [vmem:[#allocation5 + $0xe0] sm:$0xff]
    %v101 = vld [vmem:[#allocation5 + $0xe8] sm:$0xff]
    %v102 = vld [vmem:[#allocation5 + $0xf0] sm:$0xff]
    %v103 = vld [vmem:[#allocation5 + $0xf8] sm:$0xff]
    %v104 = vld [vmem:[#allocation5 + $0x100] sm:$0xff]
    %v105 = vld [vmem:[#allocation5 + $0x108] sm:$0xff]
    %v106 = vld [vmem:[#allocation5 + $0x110] sm:$0xff]
    %v107 = vld [vmem:[#allocation5 + $0x118] sm:$0xff]
    %v108 = vld [vmem:[#allocation5 + $0x120] sm:$0xff]
    %v109 = vld [vmem:[#allocation5 + $0x128] sm:$0xff]
    %v110 = vld [vmem:[#allocation5 + $0x130] sm:$0xff]
    %v111 = vld [vmem:[#allocation5 + $0x138] sm:$0xff]
    %v112 = vld [vmem:[#allocation5 + $0x140] sm:$0xff]
    %v113 = vld [vmem:[#allocation5 + $0x148] sm:$0xff]
    %v114 = vld [vmem:[#allocation5 + $0x150] sm:$0xff]
    %v115 = vld [vmem:[#allocation5 + $0x158] sm:$0xff]
    %v116 = vld [vmem:[#allocation5 + $0x160] sm:$0xff]
    %v117 = vld [vmem:[#allocation5 + $0x168] sm:$0xff]
    %v118 = vld [vmem:[#allocation5 + $0x170] sm:$0xff]
    %v119 = vld [vmem:[#allocation5 + $0x178] sm:$0xff]
    %v120 = vld [vmem:[#allocation5 + $0x180] sm:$0xff]
    %v121 = vld [vmem:[#allocation5 + $0x188] sm:$0xff]
    %v122 = vld [vmem:[#allocation5 + $0x190] sm:$0xff]
    %v123 = vld [vmem:[#allocation5 + $0x198] sm:$0xff]
    %v124 = vld [vmem:[#allocation5 + $0x1a0] sm:$0xff]
    %v125 = vld [vmem:[#allocation5 + $0x1a8] sm:$0xff]
    %v126 = vld [vmem:[#allocation5 + $0x1b0] sm:$0xff]
    %v127 = vld [vmem:[#allocation5 + $0x1b8] sm:$0xff]
    %v128 = vld [vmem:[#allocation5 + $0x1c0] sm:$0xff]
    %v129 = vld [vmem:[#allocation5 + $0x1c8] sm:$0xff]
    %v130 = vld [vmem:[#allocation5 + $0x1d0] sm:$0xff]
    %v131 = vld [vmem:[#allocation5 + $0x1d8] sm:$0xff]
    %v132 = vld [vmem:[#allocation5 + $0x1e0] sm:$0xff]
    %v133 = vld [vmem:[#allocation5 + $0x1e8] sm:$0xff]
    %v134 = vld [vmem:[#allocation5 + $0x1f0] sm:$0xff]
    %v135 = vld [vmem:[#allocation5 + $0x1f8] sm:$0xff]
    %v136 = vld [vmem:[#allocation5 + $0x200] sm:$0xff]
    %v137 = vld [vmem:[#allocation5 + $0x208] sm:$0xff]
    %v138 = vld [vmem:[#allocation5 + $0x210] sm:$0xff]
    %v139 = vld [vmem:[#allocation5 + $0x218] sm:$0xff]
    %v140 = vld [vmem:[#allocation5 + $0x220] sm:$0xff]
    %v141 = vld [vmem:[#allocation5 + $0x228] sm:$0xff]
    %v142 = vld [vmem:[#allocation5 + $0x230] sm:$0xff]
    %v143 = vld [vmem:[#allocation5 + $0x238] sm:$0xff]
    %v144 = vld [vmem:[#allocation5 + $0x240] sm:$0xff]
    %v145 = vld [vmem:[#allocation5 + $0x248] sm:$0xff]
    %v146 = vld [vmem:[#allocation5 + $0x250] sm:$0xff]
    %v147 = vld [vmem:[#allocation5 + $0x258] sm:$0xff]
    %v148 = vld [vmem:[#allocation5 + $0x260] sm:$0xff]
    %v149 = vld [vmem:[#allocation5 + $0x268] sm:$0xff]
    %v150 = vld [vmem:[#allocation5 + $0x270] sm:$0xff]
    %v151 = vld [vmem:[#allocation5 + $0x278] sm:$0xff]
    %v152 = vld [vmem:[#allocation5 + $0x280] sm:$0xff]
    %v153 = vld [vmem:[#allocation5 + $0x288] sm:$0xff]
    %v154 = vld [vmem:[#allocation5 + $0x290] sm:$0xff]
    %v155 = vld [vmem:[#allocation5 + $0x298] sm:$0xff]
    %v156 = vld [vmem:[#allocation5 + $0x2a0] sm:$0xff]
    %v157 = vld [vmem:[#allocation5 + $0x2a8] sm:$0xff]
    %v158 = vld [vmem:[#allocation5 + $0x2b0] sm:$0xff]
    %v159 = vld [vmem:[#allocation5 + $0x2b8] sm:$0xff]
    %v160 = vld [vmem:[#allocation5 + $0x2c0] sm:$0xff]
    %v161 = vld [vmem:[#allocation5 + $0x2c8] sm:$0xff]
    %v162 = vld [vmem:[#allocation5 + $0x2d0] sm:$0xff]
    %v163 = vld [vmem:[#allocation5 + $0x2d8] sm:$0xff]
    %v164 = vld [vmem:[#allocation5 + $0x2e0] sm:$0xff]
    %v165 = vld [vmem:[#allocation5 + $0x2e8] sm:$0xff]
    %v166 = vld [vmem:[#allocation5 + $0x2f0] sm:$0xff]
    %v167 = vld [vmem:[#allocation5 + $0x2f8] sm:$0xff]
    %v168 = vld [vmem:[#allocation5 + $0x300] sm:$0xff]
    %v169 = vld [vmem:[#allocation5 + $0x308] sm:$0xff]
    %v170 = vld [vmem:[#allocation5 + $0x310] sm:$0xff]
    %v171 = vld [vmem:[#allocation5 + $0x318] sm:$0xff]
    %v172 = vld [vmem:[#allocation5 + $0x320] sm:$0xff]
    %v173 = vld [vmem:[#allocation5 + $0x328] sm:$0xff]
    %v174 = vld [vmem:[#allocation5 + $0x330] sm:$0xff]
    %v175 = vld [vmem:[#allocation5 + $0x338] sm:$0xff]
    %v176 = vld [vmem:[#allocation5 + $0x340] sm:$0xff]
    %v177 = vld [vmem:[#allocation5 + $0x348] sm:$0xff]
    %v178 = vld [vmem:[#allocation5 + $0x350] sm:$0xff]
    %v179 = vld [vmem:[#allocation5 + $0x358] sm:$0xff]
    %v180 = vld [vmem:[#allocation5 + $0x360] sm:$0xff]
    %v181 = vld [vmem:[#allocation5 + $0x368] sm:$0xff]
    %v182 = vld [vmem:[#allocation5 + $0x370] sm:$0xff]
    %v183 = vld [vmem:[#allocation5 + $0x378] sm:$0xff]
    %v184 = vld [vmem:[#allocation5 + $0x380] sm:$0xff]
    %v185 = vld [vmem:[#allocation5 + $0x388] sm:$0xff]
    %v186 = vld [vmem:[#allocation5 + $0x390] sm:$0xff]
    %v187 = vld [vmem:[#allocation5 + $0x398] sm:$0xff]
    %v188 = vld [vmem:[#allocation5 + $0x3a0] sm:$0xff]
    %v189 = vld [vmem:[#allocation5 + $0x3a8] sm:$0xff]
    %v190 = vld [vmem:[#allocation5 + $0x3b0] sm:$0xff]
    %v191 = vld [vmem:[#allocation5 + $0x3b8] sm:$0xff]
    %v192 = vld [vmem:[#allocation5 + $0x3c0] sm:$0xff]
    %v193 = vld [vmem:[#allocation5 + $0x3c8] sm:$0xff]
    %v194 = vld [vmem:[#allocation5 + $0x3d0] sm:$0xff]
    %v195 = vld [vmem:[#allocation5 + $0x3d8] sm:$0xff]
    %v196 = vld [vmem:[#allocation5 + $0x3e0] sm:$0xff]
    %v197 = vld [vmem:[#allocation5 + $0x3e8] sm:$0xff]
    %v198 = vld [vmem:[#allocation5 + $0x3f0] sm:$0xff]
    %v199 = vld [vmem:[#allocation5 + $0x3f8] sm:$0xff]
    %200 = vmatprep.subr.mxu0 %v73
    %201 = vmatpush1.msra.mxu0 %v72
    %202 = vmatprep.subr.mxu0 %v77
    %203 = vmatpush1.msra.mxu0 %v76
    %204 = vmatprep.subr.mxu0 %v81
    %205 = vmatpush1.msra.mxu0 %v80
    %206 = vmatprep.subr.mxu0 %v85
    %207 = vmatpush1.msra.mxu0 %v84
    %208 = vmatprep.subr.mxu0 %v89
    %209 = vmatpush1.msra.mxu0 %v88
    %210 = vmatprep.subr.mxu0 %v93
    %211 = vmatpush1.msra.mxu0 %v92
    %212 = vmatprep.subr.mxu0 %v97
    %213 = vmatpush1.msra.mxu0 %v96
    %214 = vmatprep.subr.mxu0 %v101
    %215 = vmatpush1.msra.mxu0 %v100
    %216 = vmatprep.subr.mxu0 %v105
    %217 = vmatpush1.msra.mxu0 %v104
    %218 = vmatprep.subr.mxu0 %v109
    %219 = vmatpush1.msra.mxu0 %v108
    %220 = vmatprep.subr.mxu0 %v113
    %221 = vmatpush1.msra.mxu0 %v112
    %222 = vmatprep.subr.mxu0 %v117
    %223 = vmatpush1.msra.mxu0 %v116
    %224 = vmatprep.subr.mxu0 %v121
    %225 = vmatpush1.msra.mxu0 %v120
    %226 = vmatprep.subr.mxu0 %v125
    %227 = vmatpush1.msra.mxu0 %v124
    %228 = vmatprep.subr.mxu0 %v129
    %229 = vmatpush1.msra.mxu0 %v128
    %230 = vmatprep.subr.mxu0 %v133
    %231 = vmatpush1.msra.mxu0 %v132
    %232 = vmatprep.subr.mxu0 %v137
    %233 = vmatpush1.msra.mxu0 %v136
    %234 = vmatprep.subr.mxu0 %v141
    %235 = vmatpush1.msra.mxu0 %v140
    %236 = vmatprep.subr.mxu0 %v145
    %237 = vmatpush1.msra.mxu0 %v144
    %238 = vmatprep.subr.mxu0 %v149
    %239 = vmatpush1.msra.mxu0 %v148
    %240 = vmatprep.subr.mxu0 %v153
    %241 = vmatpush1.msra.mxu0 %v152
    %242 = vmatprep.subr.mxu0 %v157
    %243 = vmatpush1.msra.mxu0 %v156
    %244 = vmatprep.subr.mxu0 %v161
    %245 = vmatpush1.msra.mxu0 %v160
    %246 = vmatprep.subr.mxu0 %v165
    %247 = vmatpush1.msra.mxu0 %v164
    %248 = vmatprep.subr.mxu0 %v169
    %249 = vmatpush1.msra.mxu0 %v168
    %250 = vmatprep.subr.mxu0 %v173
    %251 = vmatpush1.msra.mxu0 %v172
    %252 = vmatprep.subr.mxu0 %v177
    %253 = vmatpush1.msra.mxu0 %v176
    %254 = vmatprep.subr.mxu0 %v181
    %255 = vmatpush1.msra.mxu0 %v180
    %256 = vmatprep.subr.mxu0 %v185
    %257 = vmatpush1.msra.mxu0 %v184
    %258 = vmatprep.subr.mxu0 %v189
    %259 = vmatpush1.msra.mxu0 %v188
    %260 = vmatprep.subr.mxu0 %v193
    %261 = vmatpush1.msra.mxu0 %v192
    %262 = vmatprep.subr.mxu0 %v197
    %263 = vmatpush1.msra.mxu0 %v196
    %264 = vmatprep.mubr.f32.mxu0 %v41
    %265 = vmatmul.mubr.f32.gmra.mrb[0].mxu0 %v40
    %v266 = vpop.f32.mrb[0].mxu0
    %v267 = vadd.f32 0.0, %v266
    %v268 = vpop.f32.mrb[0].mxu0
    %v269 = vadd.f32 0.0, %v268
    %270 = vmatprep.mubr.f32.mxu0 %v43
    %271 = vmatmul.mubr.f32.gmra.mrb[0].mxu0 %v42
    %v272 = vpop.f32.mrb[0].mxu0
    %v273 = vadd.f32 0.0, %v272
    %v274 = vpop.f32.mrb[0].mxu0
    %v275 = vadd.f32 0.0, %v274
    %276 = vmatprep.mubr.f32.mxu0 %v45
    %277 = vmatmul.mubr.f32.gmra.mrb[0].mxu0 %v44
    %v278 = vpop.f32.mrb[0].mxu0
    %v279 = vadd.f32 0.0, %v278
    %v280 = vpop.f32.mrb[0].mxu0
    %v281 = vadd.f32 0.0, %v280
    %282 = vmatprep.mubr.f32.mxu0 %v47
    %283 = vmatmul.mubr.f32.gmra.mrb[0].mxu0 %v46
    %v284 = vpop.f32.mrb[0].mxu0
    %v285 = vadd.f32 0.0, %v284
    %v286 = vpop.f32.mrb[0].mxu0
    %v287 = vadd.f32 0.0, %v286
    %288 = vmatprep.mubr.f32.mxu0 %v49
    %289 = vmatmul.mubr.f32.gmra.mrb[0].mxu0 %v48
    %v290 = vpop.f32.mrb[0].mxu0
    %v291 = vadd.f32 0.0, %v290
    %v292 = vpop.f32.mrb[0].mxu0
    %v293 = vadd.f32 0.0, %v292
    %294 = vmatprep.mubr.f32.mxu0 %v51
    %295 = vmatmul.mubr.f32.gmra.mrb[0].mxu0 %v50
    %v296 = vpop.f32.mrb[0].mxu0
    %v297 = vadd.f32 0.0, %v296
    %v298 = vpop.f32.mrb[0].mxu0
    %v299 = vadd.f32 0.0, %v298
    %300 = vmatprep.mubr.f32.mxu0 %v53
    %301 = vmatmul.mubr.f32.gmra.mrb[0].mxu0 %v52
    %v302 = vpop.f32.mrb[0].mxu0
    %v303 = vadd.f32 0.0, %v302
    %v304 = vpop.f32.mrb[0].mxu0
    %v305 = vadd.f32 0.0, %v304
    %306 = vmatprep.mubr.f32.mxu0 %v55
    %307 = vmatmul.mubr.f32.gmra.mrb[0].mxu0 %v54
    %v308 = vpop.f32.mrb[0].mxu0
    %v309 = vadd.f32 0.0, %v308
    %v310 = vpop.f32.mrb[0].mxu0
    %v311 = vadd.f32 0.0, %v310
    %312 = vmatprep.mubr.f32.mxu0 %v57
    %313 = vmatmul.mubr.f32.gmra.mrb[0].mxu0 %v56
    %v314 = vpop.f32.mrb[0].mxu0
    %v315 = vadd.f32 0.0, %v314
    %v316 = vpop.f32.mrb[0].mxu0
    %v317 = vadd.f32 0.0, %v316
    %318 = vmatprep.mubr.f32.mxu0 %v59
    %319 = vmatmul.mubr.f32.gmra.mrb[0].mxu0 %v58
    %v320 = vpop.f32.mrb[0].mxu0
    %v321 = vadd.f32 0.0, %v320
    %v322 = vpop.f32.mrb[0].mxu0
    %v323 = vadd.f32 0.0, %v322
    %324 = vmatprep.mubr.f32.mxu0 %v61
    %325 = vmatmul.mubr.f32.gmra.mrb[0].mxu0 %v60
    %v326 = vpop.f32.mrb[0].mxu0
    %v327 = vadd.f32 0.0, %v326
    %v328 = vpop.f32.mrb[0].mxu0
    %v329 = vadd.f32 0.0, %v328
    %330 = vmatprep.mubr.f32.mxu0 %v63
    %331 = vmatmul.mubr.f32.gmra.mrb[0].mxu0 %v62
    %v332 = vpop.f32.mrb[0].mxu0
    %v333 = vadd.f32 0.0, %v332
    %v334 = vpop.f32.mrb[0].mxu0
    %v335 = vadd.f32 0.0, %v334
    %336 = vmatprep.mubr.f32.mxu0 %v65
    %337 = vmatmul.mubr.f32.gmra.mrb[0].mxu0 %v64
    %v338 = vpop.f32.mrb[0].mxu0
    %v339 = vadd.f32 0.0, %v338
    %v340 = vpop.f32.mrb[0].mxu0
    %v341 = vadd.f32 0.0, %v340
    %342 = vmatprep.mubr.f32.mxu0 %v67
    %343 = vmatmul.mubr.f32.gmra.mrb[0].mxu0 %v66
    %v344 = vpop.f32.mrb[0].mxu0
    %v345 = vadd.f32 0.0, %v344
    %v346 = vpop.f32.mrb[0].mxu0
    %v347 = vadd.f32 0.0, %v346
    %348 = vmatprep.mubr.f32.mxu0 %v69
    %349 = vmatmul.mubr.f32.gmra.mrb[0].mxu0 %v68
    %v350 = vpop.f32.mrb[0].mxu0
    %v351 = vadd.f32 0.0, %v350
    %v352 = vpop.f32.mrb[0].mxu0
    %v353 = vadd.f32 0.0, %v352
    %354 = vmatprep.mubr.f32.mxu0 %v71
    %355 = vmatmul.mubr.f32.gmra.mrb[0].mxu0 %v70
    %v356 = vpop.f32.mrb[0].mxu0
    %v357 = vadd.f32 0.0, %v356
    %v358 = vpop.f32.mrb[0].mxu0
    %v359 = vadd.f32 0.0, %v358
    %360 = vdwg.mxu0
    %361 = vmatprep.subr.mxu0 %v75
    %362 = vmatpush1.msra.mxu0 %v74
    %363 = vmatprep.subr.mxu0 %v79
    %364 = vmatpush1.msra.mxu0 %v78
    %365 = vmatprep.subr.mxu0 %v83
    %366 = vmatpush1.msra.mxu0 %v82
    %367 = vmatprep.subr.mxu0 %v87
    %368 = vmatpush1.msra.mxu0 %v86
    %369 = vmatprep.subr.mxu0 %v91
    %370 = vmatpush1.msra.mxu0 %v90
    %371 = vmatprep.subr.mxu0 %v95
    %372 = vmatpush1.msra.mxu0 %v94
    %373 = vmatprep.subr.mxu0 %v99
    %374 = vmatpush1.msra.mxu0 %v98
    %375 = vmatprep.subr.mxu0 %v103
    %376 = vmatpush1.msra.mxu0 %v102
    %377 = vmatprep.subr.mxu0 %v107
    %378 = vmatpush1.msra.mxu0 %v106
    %379 = vmatprep.subr.mxu0 %v111
    %380 = vmatpush1.msra.mxu0 %v110
    %381 = vmatprep.subr.mxu0 %v115
    %382 = vmatpush1.msra.mxu0 %v114
    %383 = vmatprep.subr.mxu0 %v119
    %384 = vmatpush1.msra.mxu0 %v118
    %385 = vmatprep.subr.mxu0 %v123
    %386 = vmatpush1.msra.mxu0 %v122
    %387 = vmatprep.subr.mxu0 %v127
    %388 = vmatpush1.msra.mxu0 %v126
    %389 = vmatprep.subr.mxu0 %v131
    %390 = vmatpush1.msra.mxu0 %v130
    %391 = vmatprep.subr.mxu0 %v135
    %392 = vmatpush1.msra.mxu0 %v134
    %393 = vmatprep.subr.mxu0 %v139
    %394 = vmatpush1.msra.mxu0 %v138
    %395 = vmatprep.subr.mxu0 %v143
    %396 = vmatpush1.msra.mxu0 %v142
    %397 = vmatprep.subr.mxu0 %v147
    %398 = vmatpush1.msra.mxu0 %v146
    %399 = vmatprep.subr.mxu0 %v151
    %400 = vmatpush1.msra.mxu0 %v150
    %401 = vmatprep.subr.mxu0 %v155
    %402 = vmatpush1.msra.mxu0 %v154
    %403 = vmatprep.subr.mxu0 %v159
    %404 = vmatpush1.msra.mxu0 %v158
    %405 = vmatprep.subr.mxu0 %v163
    %406 = vmatpush1.msra.mxu0 %v162
    %407 = vmatprep.subr.mxu0 %v167
    %408 = vmatpush1.msra.mxu0 %v166
    %409 = vmatprep.subr.mxu0 %v171
    %410 = vmatpush1.msra.mxu0 %v170
    %411 = vmatprep.subr.mxu0 %v175
    %412 = vmatpush1.msra.mxu0 %v174
    %413 = vmatprep.subr.mxu0 %v179
    %414 = vmatpush1.msra.mxu0 %v178
    %415 = vmatprep.subr.mxu0 %v183
    %416 = vmatpush1.msra.mxu0 %v182
    %417 = vmatprep.subr.mxu0 %v187
    %418 = vmatpush1.msra.mxu0 %v186
    %419 = vmatprep.subr.mxu0 %v191
    %420 = vmatpush1.msra.mxu0 %v190
    %421 = vmatprep.subr.mxu0 %v195
    %422 = vmatpush1.msra.mxu0 %v194
    %423 = vmatprep.subr.mxu0 %v199
    %424 = vmatpush1.msra.mxu0 %v198
    %425 = vmatprep.mubr.f32.mxu0 %v41
    %426 = vmatmul.mubr.f32.gmra.mrb[0].mxu0 %v40
    %v427 = vpop.f32.mrb[0].mxu0
    %v428 = vadd.f32 0.0, %v427
    %v429 = vpop.f32.mrb[0].mxu0
    %v430 = vadd.f32 0.0, %v429
    %431 = vmatprep.mubr.f32.mxu0 %v43
    %432 = vmatmul.mubr.f32.gmra.mrb[0].mxu0 %v42
    %v433 = vpop.f32.mrb[0].mxu0
    %v434 = vadd.f32 0.0, %v433
    %v435 = vpop.f32.mrb[0].mxu0
    %v436 = vadd.f32 0.0, %v435
    %437 = vmatprep.mubr.f32.mxu0 %v45
    %438 = vmatmul.mubr.f32.gmra.mrb[0].mxu0 %v44
    %v439 = vpop.f32.mrb[0].mxu0
    %v440 = vadd.f32 0.0, %v439
    %v441 = vpop.f32.mrb[0].mxu0
    %v442 = vadd.f32 0.0, %v441
    %443 = vmatprep.mubr.f32.mxu0 %v47
    %444 = vmatmul.mubr.f32.gmra.mrb[0].mxu0 %v46
    %v445 = vpop.f32.mrb[0].mxu0
    %v446 = vadd.f32 0.0, %v445
    %v447 = vpop.f32.mrb[0].mxu0
    %v448 = vadd.f32 0.0, %v447
    %449 = vmatprep.mubr.f32.mxu0 %v49
    %450 = vmatmul.mubr.f32.gmra.mrb[0].mxu0 %v48
    %v451 = vpop.f32.mrb[0].mxu0
    %v452 = vadd.f32 0.0, %v451
    %v453 = vpop.f32.mrb[0].mxu0
    %v454 = vadd.f32 0.0, %v453
    %455 = vmatprep.mubr.f32.mxu0 %v51
    %456 = vmatmul.mubr.f32.gmra.mrb[0].mxu0 %v50
    %v457 = vpop.f32.mrb[0].mxu0
    %v458 = vadd.f32 0.0, %v457
    %v459 = vpop.f32.mrb[0].mxu0
    %v460 = vadd.f32 0.0, %v459
    %461 = vmatprep.mubr.f32.mxu0 %v53
    %462 = vmatmul.mubr.f32.gmra.mrb[0].mxu0 %v52
    %v463 = vpop.f32.mrb[0].mxu0
    %v464 = vadd.f32 0.0, %v463
    %v465 = vpop.f32.mrb[0].mxu0
    %v466 = vadd.f32 0.0, %v465
    %467 = vmatprep.mubr.f32.mxu0 %v55
    %468 = vmatmul.mubr.f32.gmra.mrb[0].mxu0 %v54
    %v469 = vpop.f32.mrb[0].mxu0
    %v470 = vadd.f32 0.0, %v469
    %v471 = vpop.f32.mrb[0].mxu0
    %v472 = vadd.f32 0.0, %v471
    %473 = vmatprep.mubr.f32.mxu0 %v57
    %474 = vmatmul.mubr.f32.gmra.mrb[0].mxu0 %v56
    %v475 = vpop.f32.mrb[0].mxu0
    %v476 = vadd.f32 0.0, %v475
    %v477 = vpop.f32.mrb[0].mxu0
    %v478 = vadd.f32 0.0, %v477
    %479 = vmatprep.mubr.f32.mxu0 %v59
    %480 = vmatmul.mubr.f32.gmra.mrb[0].mxu0 %v58
    %v481 = vpop.f32.mrb[0].mxu0
    %v482 = vadd.f32 0.0, %v481
    %v483 = vpop.f32.mrb[0].mxu0
    %v484 = vadd.f32 0.0, %v483
    %485 = vmatprep.mubr.f32.mxu0 %v61
    %486 = vmatmul.mubr.f32.gmra.mrb[0].mxu0 %v60
    %v487 = vpop.f32.mrb[0].mxu0
    %v488 = vadd.f32 0.0, %v487
    %v489 = vpop.f32.mrb[0].mxu0
    %v490 = vadd.f32 0.0, %v489
    %491 = vmatprep.mubr.f32.mxu0 %v63
    %492 = vmatmul.mubr.f32.gmra.mrb[0].mxu0 %v62
    %v493 = vpop.f32.mrb[0].mxu0
    %v494 = vadd.f32 0.0, %v493
    %v495 = vpop.f32.mrb[0].mxu0
    %v496 = vadd.f32 0.0, %v495
    %497 = vmatprep.mubr.f32.mxu0 %v65
    %498 = vmatmul.mubr.f32.gmra.mrb[0].mxu0 %v64
    %v499 = vpop.f32.mrb[0].mxu0
    %v500 = vadd.f32 0.0, %v499
    %v501 = vpop.f32.mrb[0].mxu0
    %v502 = vadd.f32 0.0, %v501
    %503 = vmatprep.mubr.f32.mxu0 %v67
    %504 = vmatmul.mubr.f32.gmra.mrb[0].mxu0 %v66
    %v505 = vpop.f32.mrb[0].mxu0
    %v506 = vadd.f32 0.0, %v505
    %v507 = vpop.f32.mrb[0].mxu0
    %v508 = vadd.f32 0.0, %v507
    %509 = vmatprep.mubr.f32.mxu0 %v69
    %510 = vmatmul.mubr.f32.gmra.mrb[0].mxu0 %v68
    %v511 = vpop.f32.mrb[0].mxu0
    %v512 = vadd.f32 0.0, %v511
    %v513 = vpop.f32.mrb[0].mxu0
    %v514 = vadd.f32 0.0, %v513
    %515 = vmatprep.mubr.f32.mxu0 %v71
    %516 = vmatmul.mubr.f32.gmra.mrb[0].mxu0 %v70
    %v517 = vpop.f32.mrb[0].mxu0
    %v518 = vadd.f32 0.0, %v517
    %v519 = vpop.f32.mrb[0].mxu0
    %v520 = vadd.f32 0.0, %v519
    %521 = vdwg.mxu0
    %522 = vst [vmem:[#allocation7] sm:$0xff] %v267
    %523 = vst [vmem:[#allocation7 + $0x8] sm:$0xff] %v269
    %524 = vst [vmem:[#allocation7 + $0x10] sm:$0xff] %v428
    %525 = vst [vmem:[#allocation7 + $0x18] sm:$0xff] %v430
    %526 = vst [vmem:[#allocation7 + $0x20] sm:$0xff] %v273
    %527 = vst [vmem:[#allocation7 + $0x28] sm:$0xff] %v275
    %528 = vst [vmem:[#allocation7 + $0x30] sm:$0xff] %v434
    %529 = vst [vmem:[#allocation7 + $0x38] sm:$0xff] %v436
    %530 = vst [vmem:[#allocation7 + $0x40] sm:$0xff] %v279
    %531 = vst [vmem:[#allocation7 + $0x48] sm:$0xff] %v281
    %532 = vst [vmem:[#allocation7 + $0x50] sm:$0xff] %v440
    %533 = vst [vmem:[#allocation7 + $0x58] sm:$0xff] %v442
    %534 = vst [vmem:[#allocation7 + $0x60] sm:$0xff] %v285
    %535 = vst [vmem:[#allocation7 + $0x68] sm:$0xff] %v287
    %536 = vst [vmem:[#allocation7 + $0x70] sm:$0xff] %v446
    %537 = vst [vmem:[#allocation7 + $0x78] sm:$0xff] %v448
    %538 = vst [vmem:[#allocation7 + $0x80] sm:$0xff] %v291
    %539 = vst [vmem:[#allocation7 + $0x88] sm:$0xff] %v293
    %540 = vst [vmem:[#allocation7 + $0x90] sm:$0xff] %v452
    %541 = vst [vmem:[#allocation7 + $0x98] sm:$0xff] %v454
    %542 = vst [vmem:[#allocation7 + $0xa0] sm:$0xff] %v297
    %543 = vst [vmem:[#allocation7 + $0xa8] sm:$0xff] %v299
    %544 = vst [vmem:[#allocation7 + $0xb0] sm:$0xff] %v458
    %545 = vst [vmem:[#allocation7 + $0xb8] sm:$0xff] %v460
    %546 = vst [vmem:[#allocation7 + $0xc0] sm:$0xff] %v303
    %547 = vst [vmem:[#allocation7 + $0xc8] sm:$0xff] %v305
    %548 = vst [vmem:[#allocation7 + $0xd0] sm:$0xff] %v464
    %549 = vst [vmem:[#allocation7 + $0xd8] sm:$0xff] %v466
    %550 = vst [vmem:[#allocation7 + $0xe0] sm:$0xff] %v309
    %551 = vst [vmem:[#allocation7 + $0xe8] sm:$0xff] %v311
    %552 = vst [vmem:[#allocation7 + $0xf0] sm:$0xff] %v470
    %553 = vst [vmem:[#allocation7 + $0xf8] sm:$0xff] %v472
    %554 = vst [vmem:[#allocation7 + $0x100] sm:$0xff] %v315
    %555 = vst [vmem:[#allocation7 + $0x108] sm:$0xff] %v317
    %556 = vst [vmem:[#allocation7 + $0x110] sm:$0xff] %v476
    %557 = vst [vmem:[#allocation7 + $0x118] sm:$0xff] %v478
    %558 = vst [vmem:[#allocation7 + $0x120] sm:$0xff] %v321
    %559 = vst [vmem:[#allocation7 + $0x128] sm:$0xff] %v323
    %560 = vst [vmem:[#allocation7 + $0x130] sm:$0xff] %v482
    %561 = vst [vmem:[#allocation7 + $0x138] sm:$0xff] %v484
    %562 = vst [vmem:[#allocation7 + $0x140] sm:$0xff] %v327
    %563 = vst [vmem:[#allocation7 + $0x148] sm:$0xff] %v329
    %564 = vst [vmem:[#allocation7 + $0x150] sm:$0xff] %v488
    %565 = vst [vmem:[#allocation7 + $0x158] sm:$0xff] %v490
    %566 = vst [vmem:[#allocation7 + $0x160] sm:$0xff] %v333
    %567 = vst [vmem:[#allocation7 + $0x168] sm:$0xff] %v335
    %568 = vst [vmem:[#allocation7 + $0x170] sm:$0xff] %v494
    %569 = vst [vmem:[#allocation7 + $0x178] sm:$0xff] %v496
    %570 = vst [vmem:[#allocation7 + $0x180] sm:$0xff] %v339
    %571 = vst [vmem:[#allocation7 + $0x188] sm:$0xff] %v341
    %572 = vst [vmem:[#allocation7 + $0x190] sm:$0xff] %v500
    %573 = vst [vmem:[#allocation7 + $0x198] sm:$0xff] %v502
    %574 = vst [vmem:[#allocation7 + $0x1a0] sm:$0xff] %v345
    %575 = vst [vmem:[#allocation7 + $0x1a8] sm:$0xff] %v347
    %576 = vst [vmem:[#allocation7 + $0x1b0] sm:$0xff] %v506
    %577 = vst [vmem:[#allocation7 + $0x1b8] sm:$0xff] %v508
    %578 = vst [vmem:[#allocation7 + $0x1c0] sm:$0xff] %v351
    %579 = vst [vmem:[#allocation7 + $0x1c8] sm:$0xff] %v353
    %580 = vst [vmem:[#allocation7 + $0x1d0] sm:$0xff] %v512
    %581 = vst [vmem:[#allocation7 + $0x1d8] sm:$0xff] %v514
    %582 = vst [vmem:[#allocation7 + $0x1e0] sm:$0xff] %v357
    %583 = vst [vmem:[#allocation7 + $0x1e8] sm:$0xff] %v359
    %584 = vst [vmem:[#allocation7 + $0x1f0] sm:$0xff] %v518
    %585 = vst [vmem:[#allocation7 + $0x1f8] sm:$0xff] %v520
    // Predicated region
    $region18: #{tpu_custom_call.1} parent=1 // pred_check
      _
    $region19: #{tpu_custom_call.1} parent=1 // pred_check_branch
      %587 = sbr.rel (0) target = $region21
    $region20: #{tpu_custom_call.1} parent=1 // pred_region
      %s589 = ssub.s32 8192, 8192
      %590 = vsyncadd [#allocation4], %s589
      %s591 = sshll.u32 [#allocation7], 4
      %s592 = int_to_ptr.vmem [resolvable:$true] %s591
      %597 = dma.vmem_to_hbm [thread:$0]  %s592, 8192, %s2, [#allocation4], 512, 512, 32
    $region21: #{tpu_custom_call.1} parent=1 // pred_fallthru
      _
    // Predicated region
    $region22: #{tpu_custom_call.1} parent=1 // pred_check
      _
    $region23: #{tpu_custom_call.1} parent=1 // pred_check_branch
      %599 = sbr.rel (0) target = $region25
    $region24: #{tpu_custom_call.1} parent=1 // pred_region
      %600 = dma.done [#allocation4], 8192
    $region25: #{tpu_custom_call.1} parent=1 // pred_fallthru
      _
    %601 = vsyncpa [#allocation3], 1
    %602 = vsyncpa [#allocation6], 1
    %603 = vsyncpa [#allocation4], 1

</llo_original>
